<compile_context>
chip_gen: v7x
topology: tpu7x:2x2x1
jax: 0.10.0
libtpu: 0.0.40
codegen_flags: <defaults>
</compile_context>

<pallas_src>
import functools

import jax
import jax.numpy as jnp
from jax.experimental import pallas as pl
from jax.experimental.pallas import tpu as pltpu

EPS = 1e-5


def _bn_stats_kernel(x_ref, gamma_ref, beta_ref, scale_ref, shift_ref,
                     sum_sc, sumsq_sc, *, m_total):
    n = pl.program_id(0)
    t = pl.program_id(1)

    @pl.when(jnp.logical_and(n == 0, t == 0))
    def _():
        sum_sc[...] = jnp.zeros_like(sum_sc)
        sumsq_sc[...] = jnp.zeros_like(sumsq_sc)

    x = x_ref[0].astype(jnp.float32)                       # (C_in, tile_hw)
    sum_sc[...] += jnp.sum(x, axis=1, keepdims=True)       # (C_in, 1)
    sumsq_sc[...] += jnp.sum(x * x, axis=1, keepdims=True)

    @pl.when(jnp.logical_and(n == pl.num_programs(0) - 1,
                             t == pl.num_programs(1) - 1))
    def _():
        mean = sum_sc[...] / m_total
        # NOTE: sumsq/M - mean^2 can cancel for very large M with tiny
        # variance; fine at these scales (PyTorch BN uses biased variance).
        var = sumsq_sc[...] / m_total - mean * mean
        inv = jax.lax.rsqrt(var + EPS)
        scale = gamma_ref[...] * inv                       # (C_in, 1)
        scale_ref[...] = scale
        shift_ref[...] = beta_ref[...] - mean * scale


def _transition_kernel(x_ref, scale_ref, shift_ref, w_ref, b_ref, o_ref, *,
                       matmul_dtype):
    x = x_ref[0].astype(jnp.float32)                       # (C_in, tile_hw)
    xn = x * scale_ref[...] + shift_ref[...]               # folded BatchNorm
    xr = jnp.maximum(xn, 0.0)                              # ReLU
    # 1x1 conv == channel matmul: (C_out, C_in) @ (C_in, tile_hw)
    y = jnp.dot(w_ref[...].astype(matmul_dtype),
                xr.astype(matmul_dtype),
                preferred_element_type=jnp.float32)
    o_ref[0] = (y + b_ref[...]).astype(o_ref.dtype)


def _choose_tile_hw(hw, max_tile=2048):
    """Largest lane-dense tile that evenly divides H*W (full extent is always legal)."""
    if hw <= max_tile:
        return hw
    start = max_tile - (max_tile % 128)
    for t in range(start, 0, -128):
        if hw % t == 0:
            return t
    return hw  # fallback: single full-extent tile


def transition_forward(x_nchw, gamma, beta, conv_w, conv_b, *,
                       max_tile_hw=2048, use_bf16_matmul=False):
    """x_nchw: (N, C_in, H, W) f32.  conv_w: (C_out, C_in, 1, 1), conv_b: (C_out,)."""
    n, c_in, h, w = x_nchw.shape
    c_out = conv_w.shape[0]
    hw = h * w
    tile_hw = _choose_tile_hw(hw, max_tile_hw)
    assert hw % tile_hw == 0
    grid = (n, hw // tile_hw)

    x3d = x_nchw.reshape(n, c_in, hw)                      # free reshape, no transpose
    gamma2d = gamma.reshape(c_in, 1).astype(jnp.float32)
    beta2d = beta.reshape(c_in, 1).astype(jnp.float32)
    w_mat = conv_w[:, :, 0, 0].astype(jnp.float32)         # (C_out, C_in)
    b2d = conv_b.reshape(c_out, 1).astype(jnp.float32)

    # ---- Pass 1: per-channel batch statistics, folded into (scale, shift). ----
    scale, shift = pl.pallas_call(
        functools.partial(_bn_stats_kernel, m_total=float(n * hw)),
        out_shape=(jax.ShapeDtypeStruct((c_in, 1), jnp.float32),
                   jax.ShapeDtypeStruct((c_in, 1), jnp.float32)),
        grid_spec=pltpu.PrefetchScalarGridSpec(
            num_scalar_prefetch=0,
            grid=grid,
            in_specs=[
                pl.BlockSpec((1, c_in, tile_hw), lambda i, j: (i, 0, j)),  # x
                pl.BlockSpec((c_in, 1), lambda i, j: (0, 0)),              # gamma
                pl.BlockSpec((c_in, 1), lambda i, j: (0, 0)),              # beta
            ],
            out_specs=[
                pl.BlockSpec((c_in, 1), lambda i, j: (0, 0)),              # scale
                pl.BlockSpec((c_in, 1), lambda i, j: (0, 0)),              # shift
            ],
            scratch_shapes=[pltpu.VMEM((c_in, 1), jnp.float32),            # sum
                            pltpu.VMEM((c_in, 1), jnp.float32)],           # sum sq
        ),
        compiler_params=pltpu.CompilerParams(
            dimension_semantics=("arbitrary", "arbitrary")),
    )(x3d, gamma2d, beta2d)

    # bf16 MXU path: recommended on v6e/v7x for large channel counts; kept f32
    # by default so the demo matches the f32 reference bit-for-tolerance.
    matmul_dtype = jnp.bfloat16 if use_bf16_matmul else jnp.float32

    # ---- Pass 2: single streaming pass — normalize + ReLU + 1x1 conv + bias. ----
    # (For very large tiles/channels, raise vmem_limit_bytes in CompilerParams.)
    out3d = pl.pallas_call(
        functools.partial(_transition_kernel, matmul_dtype=matmul_dtype),
        out_shape=jax.ShapeDtypeStruct((n, c_out, hw), jnp.float32),
        grid_spec=pltpu.PrefetchScalarGridSpec(
            num_scalar_prefetch=0,
            grid=grid,
            in_specs=[
                pl.BlockSpec((1, c_in, tile_hw), lambda i, j: (i, 0, j)),  # x
                pl.BlockSpec((c_in, 1), lambda i, j: (0, 0)),              # scale
                pl.BlockSpec((c_in, 1), lambda i, j: (0, 0)),              # shift
                pl.BlockSpec((c_out, c_in), lambda i, j: (0, 0)),          # conv W
                pl.BlockSpec((c_out, 1), lambda i, j: (0, 0)),             # conv b
            ],
            out_specs=pl.BlockSpec((1, c_out, tile_hw), lambda i, j: (i, 0, j)),
        ),
        compiler_params=pltpu.CompilerParams(
            dimension_semantics=("parallel", "parallel")),
    )(x3d, scale, shift, w_mat, b2d)

    return out3d.reshape(n, c_out, h, w)


def _reference(x_nchw, gamma, beta, conv_w, conv_b):
    # Pure-JAX reference of training-mode BatchNorm2d -> ReLU -> 1x1 conv.
    mean = jnp.mean(x_nchw, axis=(0, 2, 3), keepdims=True)
    var = jnp.mean((x_nchw - mean) ** 2, axis=(0, 2, 3), keepdims=True)
    xn = (x_nchw - mean) * jax.lax.rsqrt(var + EPS)
    xn = xn * gamma.reshape(1, -1, 1, 1) + beta.reshape(1, -1, 1, 1)
    xr = jnp.maximum(xn, 0.0)
    y = jnp.einsum("nchw,oc->nohw", xr, conv_w[:, :, 0, 0])
    return y + conv_b.reshape(1, -1, 1, 1)


if __name__ == "__main__":
    key = jax.random.PRNGKey(0)
    k_x, k_g, k_b, k_w, k_c = jax.random.split(key, 5)

    N, C_IN, H, W = 2, 4, 16, 16
    C_OUT = 8

    x = jax.random.normal(k_x, (N, C_IN, H, W), dtype=jnp.float32)
    # Deterministic synthetic parameters (BatchNorm affine + 1x1 conv).
    gamma = 1.0 + 0.1 * jax.random.normal(k_g, (C_IN,), dtype=jnp.float32)
    beta = 0.1 * jax.random.normal(k_b, (C_IN,), dtype=jnp.float32)
    conv_w = 0.2 * jax.random.normal(k_w, (C_OUT, C_IN, 1, 1), dtype=jnp.float32)
    conv_b = 0.05 * jax.random.normal(k_c, (C_OUT,), dtype=jnp.float32)

    out = transition_forward(x, gamma, beta, conv_w, conv_b)
    out = jax.block_until_ready(out)

    ref = _reference(x, gamma, beta, conv_w, conv_b)
    assert out.shape == (N, C_OUT, H, W)
    assert jnp.allclose(out, ref, atol=1e-4, rtol=1e-4)

    print("KERNEL_OK")
</pallas_src>

<mosaic_0001>
module attributes {stable_mosaic.version = 11 : i64} {
  func.func @_bn_stats_kernel(%arg0: i32, %arg1: i32, %arg2: memref<1x4x256xf32, #tpu.memory_space<vmem>>, %arg3: memref<4x1xf32, #tpu.memory_space<vmem>>, %arg4: memref<4x1xf32, #tpu.memory_space<vmem>>, %arg5: memref<4x1xf32, #tpu.memory_space<vmem>>, %arg6: memref<4x1xf32, #tpu.memory_space<vmem>>, %arg7: memref<4x1xf32, #tpu.memory_space<vmem>>, %arg8: memref<4x1xf32, #tpu.memory_space<vmem>>) attributes {dimension_semantics = [#tpu.dimension_semantics<arbitrary>, #tpu.dimension_semantics<arbitrary>], iteration_bounds = array<i64: 2, 1>, scalar_prefetch = 0 : i64, scratch_operands = 2 : i64, tpu.core_type = #tpu.core_type<tc>, window_params = [{transform_indices = @transform_0, window_bounds = array<i64: 1, 4, 256>}, {pipeline_mode = #tpu.pipeline_mode<synchronous>, transform_indices = @transform_1, window_bounds = array<i64: 4, 1>}, {pipeline_mode = #tpu.pipeline_mode<synchronous>, transform_indices = @transform_2, window_bounds = array<i64: 4, 1>}, {pipeline_mode = #tpu.pipeline_mode<synchronous>, transform_indices = @transform_3, window_bounds = array<i64: 4, 1>}, {pipeline_mode = #tpu.pipeline_mode<synchronous>, transform_indices = @transform_4, window_bounds = array<i64: 4, 1>}]} {
    %c0_i32 = arith.constant 0 : i32
    %0 = arith.cmpi eq, %arg0, %c0_i32 : i32
    %c0_i32_0 = arith.constant 0 : i32
    %1 = arith.cmpi eq, %arg1, %c0_i32_0 : i32
    %2 = arith.andi %0, %1 : i1
    %3 = arith.extui %2 : i1 to i32
    %c0_i32_1 = arith.constant 0 : i32
    %4 = arith.cmpi ne, %3, %c0_i32_1 : i32
    scf.if %4 {
      %cst_15 = arith.constant 0.000000e+00 : f32
      %23 = vector.broadcast %cst_15 : f32 to vector<4x1xf32>
      %c0_16 = arith.constant 0 : index
      %c0_17 = arith.constant 0 : index
      %24 = vector.load %arg7[%c0_16, %c0_17] : memref<4x1xf32, #tpu.memory_space<vmem>>, vector<4x1xf32>
      tpu.vector_store %arg7[%c0_16, %c0_17], %23 {strides = array<i32>} : memref<4x1xf32, #tpu.memory_space<vmem>>, vector<4x1xf32>,
      %cst_18 = arith.constant 0.000000e+00 : f32
      %25 = vector.broadcast %cst_18 : f32 to vector<4x1xf32>
      %c0_19 = arith.constant 0 : index
      %c0_20 = arith.constant 0 : index
      %26 = vector.load %arg8[%c0_19, %c0_20] : memref<4x1xf32, #tpu.memory_space<vmem>>, vector<4x1xf32>
      tpu.vector_store %arg8[%c0_19, %c0_20], %25 {strides = array<i32>} : memref<4x1xf32, #tpu.memory_space<vmem>>, vector<4x1xf32>,
    } else {
    }
    %c0 = arith.constant 0 : index
    %c0_2 = arith.constant 0 : index
    %c0_3 = arith.constant 0 : index
    %5 = vector.load %arg2[%c0, %c0_2, %c0_3] : memref<1x4x256xf32, #tpu.memory_space<vmem>>, vector<1x4x256xf32>
    %6 = vector.shape_cast %5 : vector<1x4x256xf32> to vector<4x256xf32>
    %c0_4 = arith.constant 0 : index
    %c0_5 = arith.constant 0 : index
    %7 = vector.load %arg7[%c0_4, %c0_5] : memref<4x1xf32, #tpu.memory_space<vmem>>, vector<4x1xf32>
    %cst = arith.constant dense<0.000000e+00> : vector<4xf32>
    %8 = vector.multi_reduction <add>, %6, %cst [1] : vector<4x256xf32> to vector<4xf32>
    %9 = vector.shape_cast %8 : vector<4xf32> to vector<4x1xf32>
    %10 = arith.addf %7, %9 : vector<4x1xf32>
    %c0_6 = arith.constant 0 : index
    %c0_7 = arith.constant 0 : index
    %11 = vector.load %arg7[%c0_6, %c0_7] : memref<4x1xf32, #tpu.memory_space<vmem>>, vector<4x1xf32>
    tpu.vector_store %arg7[%c0_6, %c0_7], %10 {strides = array<i32>} : memref<4x1xf32, #tpu.memory_space<vmem>>, vector<4x1xf32>,
    %c0_8 = arith.constant 0 : index
    %c0_9 = arith.constant 0 : index
    %12 = vector.load %arg8[%c0_8, %c0_9] : memref<4x1xf32, #tpu.memory_space<vmem>>, vector<4x1xf32>
    %13 = arith.mulf %6, %6 : vector<4x256xf32>
    %cst_10 = arith.constant dense<0.000000e+00> : vector<4xf32>
    %14 = vector.multi_reduction <add>, %13, %cst_10 [1] : vector<4x256xf32> to vector<4xf32>
    %15 = vector.shape_cast %14 : vector<4xf32> to vector<4x1xf32>
    %16 = arith.addf %12, %15 : vector<4x1xf32>
    %c0_11 = arith.constant 0 : index
    %c0_12 = arith.constant 0 : index
    %17 = vector.load %arg8[%c0_11, %c0_12] : memref<4x1xf32, #tpu.memory_space<vmem>>, vector<4x1xf32>
    tpu.vector_store %arg8[%c0_11, %c0_12], %16 {strides = array<i32>} : memref<4x1xf32, #tpu.memory_space<vmem>>, vector<4x1xf32>,
    %c1_i32 = arith.constant 1 : i32
    %18 = arith.cmpi eq, %arg0, %c1_i32 : i32
    %c0_i32_13 = arith.constant 0 : i32
    %19 = arith.cmpi eq, %arg1, %c0_i32_13 : i32
    %20 = arith.andi %18, %19 : i1
    %21 = arith.extui %20 : i1 to i32
    %c0_i32_14 = arith.constant 0 : i32
    %22 = arith.cmpi ne, %21, %c0_i32_14 : i32
    scf.if %22 {
      %c0_15 = arith.constant 0 : index
      %c0_16 = arith.constant 0 : index
      %23 = vector.load %arg7[%c0_15, %c0_16] : memref<4x1xf32, #tpu.memory_space<vmem>>, vector<4x1xf32>
      %cst_17 = arith.constant 5.120000e+02 : f32
      %24 = vector.broadcast %cst_17 : f32 to vector<4x1xf32>
      %25 = arith.divf %23, %24 : vector<4x1xf32>
      %c0_18 = arith.constant 0 : index
      %c0_19 = arith.constant 0 : index
      %26 = vector.load %arg8[%c0_18, %c0_19] : memref<4x1xf32, #tpu.memory_space<vmem>>, vector<4x1xf32>
      %cst_20 = arith.constant 5.120000e+02 : f32
      %27 = vector.broadcast %cst_20 : f32 to vector<4x1xf32>
      %28 = arith.divf %26, %27 : vector<4x1xf32>
      %29 = arith.mulf %25, %25 : vector<4x1xf32>
      %30 = arith.subf %28, %29 : vector<4x1xf32>
      %cst_21 = arith.constant 9.99999974E-6 : f32
      %31 = vector.broadcast %cst_21 : f32 to vector<4x1xf32>
      %32 = arith.addf %30, %31 : vector<4x1xf32>
      %33 = math.rsqrt %32 : vector<4x1xf32>
      %c0_22 = arith.constant 0 : index
      %c0_23 = arith.constant 0 : index
      %34 = vector.load %arg3[%c0_22, %c0_23] : memref<4x1xf32, #tpu.memory_space<vmem>>, vector<4x1xf32>
      %35 = arith.mulf %34, %33 : vector<4x1xf32>
      %c0_24 = arith.constant 0 : index
      %c0_25 = arith.constant 0 : index
      %36 = vector.load %arg5[%c0_24, %c0_25] : memref<4x1xf32, #tpu.memory_space<vmem>>, vector<4x1xf32>
      tpu.vector_store %arg5[%c0_24, %c0_25], %35 {strides = array<i32>} : memref<4x1xf32, #tpu.memory_space<vmem>>, vector<4x1xf32>,
      %c0_26 = arith.constant 0 : index
      %c0_27 = arith.constant 0 : index
      %37 = vector.load %arg4[%c0_26, %c0_27] : memref<4x1xf32, #tpu.memory_space<vmem>>, vector<4x1xf32>
      %38 = arith.mulf %25, %35 : vector<4x1xf32>
      %39 = arith.subf %37, %38 : vector<4x1xf32>
      %c0_28 = arith.constant 0 : index
      %c0_29 = arith.constant 0 : index
      %40 = vector.load %arg6[%c0_28, %c0_29] : memref<4x1xf32, #tpu.memory_space<vmem>>, vector<4x1xf32>
      tpu.vector_store %arg6[%c0_28, %c0_29], %39 {strides = array<i32>} : memref<4x1xf32, #tpu.memory_space<vmem>>, vector<4x1xf32>,
    } else {
    }
    return
  }
  func.func @transform_0(%arg0: i32, %arg1: i32) -> (i32, i32, i32) {
    %c0_i32 = arith.constant 0 : i32
    %c0_i32_0 = arith.constant 0 : i32
    return %arg0, %c0_i32, %arg1 : i32, i32, i32
  }
  func.func @transform_1(%arg0: i32, %arg1: i32) -> (i32, i32) {
    %c0_i32 = arith.constant 0 : i32
    %c0_i32_0 = arith.constant 0 : i32
    %c0_i32_1 = arith.constant 0 : i32
    return %c0_i32, %c0_i32_0 : i32, i32
  }
  func.func @transform_2(%arg0: i32, %arg1: i32) -> (i32, i32) {
    %c0_i32 = arith.constant 0 : i32
    %c0_i32_0 = arith.constant 0 : i32
    %c0_i32_1 = arith.constant 0 : i32
    return %c0_i32, %c0_i32_0 : i32, i32
  }
  func.func @transform_3(%arg0: i32, %arg1: i32) -> (i32, i32) {
    %c0_i32 = arith.constant 0 : i32
    %c0_i32_0 = arith.constant 0 : i32
    %c0_i32_1 = arith.constant 0 : i32
    return %c0_i32, %c0_i32_0 : i32, i32
  }
  func.func @transform_4(%arg0: i32, %arg1: i32) -> (i32, i32) {
    %c0_i32 = arith.constant 0 : i32
    %c0_i32_0 = arith.constant 0 : i32
    %c0_i32_1 = arith.constant 0 : i32
    return %c0_i32, %c0_i32_0 : i32, i32
  }
}

</mosaic_0001>

<llo_original>
// kernel: tpu_custom_call.1
$region0: #{tpu_custom_call.1}
  #allocation0 [shape = 'u32[]', space=smem, size = 0x4, offset = 0x4, fixed_abs, tag = 'smem constant byte address 0x4 - core index']
  #allocation1 [shape = 'u32[144,128]{1,0:T(1,128)}', space=vmem, size = 0x12000, scoped, tag = 'internal scratch']
  #allocation2 [shape = 'f32[4,1]{1,0:T(4,128)}', space=vmem, size = 0x800, scoped, tag = 'scratch operand']
  #allocation3 [shape = 'f32[4,1]{1,0:T(4,128)}', space=vmem, size = 0x800, scoped, tag = 'scratch operand']
  %s0 = inlined_call_operand.hbm [shape: f32[2,4,256], index: 0, kind: input, shape index: {}]
  %s1 = inlined_call_operand.vmem [shape: f32[4,1], index: 1, kind: input, shape index: {}]
  %s2 = inlined_call_operand.vmem [shape: f32[4,1], index: 2, kind: input, shape index: {}]
  %s3 = inlined_call_operand.vmem [shape: f32[4,1], index: 3, kind: output, shape index: {0}]
  %s4 = inlined_call_operand.vmem [shape: f32[4,1], index: 4, kind: output, shape index: {1}]
  %5 = xla_tuple %s3, %s4
  %s6 = sld [smem:[#allocation0]]
  $region65: #{tpu_custom_call.1} parent=0
    _
  %s8 = ssub.s32 1, %s6
  %s9 = scalar_select 0, %s8, %s6
  $region1: #{tpu_custom_call.1} parent=0
    #allocation4 [shape = 'u8[8192]{0}', space=vmem, size = 0x2000, scoped, tag = 'input window, operand 0']
    #allocation5 [shape = 's32[2]{0}', space=sflag, size = 0x8, scoped, tag = 'scoped memory for tpu_custom_call.1']
    %10 = vsyncpa [#allocation5], 0
    %s11 = scalar_lea.sflag [#allocation5], 1
    %12 = vsyncpa %s11, 0
    loop: start=0, step=1, limit=4
    $region2: #{tpu_custom_call.1} parent=1 // loop_pre_header
      _
    $region3: #{tpu_custom_call.1} parent=1 // loop_header
      %s14 = sphi 0, %s18
      %p15 = scmp.ge.s32.totalorder %s14, 4
      %s21 = sphi 0, %s33
      %s22 = sphi 0, %s29
      %s23 = sphi 0, %s21
      %s24 = sphi 0, %s22
      %s25 = sphi 0, %s23
      %s26 = sphi 0, %s24
      %s38 = sphi 0, %s40
      %s41 = sphi 0, %s38
      %s42 = sphi 0, %s41
      %s58 = sphi 0, %s42
      %s62 = sphi 0, %s62
      %s64 = sphi 0, %s62
      %s65 = sphi 0, %s64
      %s79 = sphi 0, %s65
      %s83 = sphi 0, %s83
      %s85 = sphi 0, %s83
      %s86 = sphi 0, %s85
      %s100 = sphi 0, %s86
      %s104 = sphi 0, %s104
      %s106 = sphi 0, %s104
      %s107 = sphi 0, %s106
      %s121 = sphi 0, %s107
      %s125 = sphi 0, %s125
      %s127 = sphi 0, %s125
      %s128 = sphi 0, %s127
      %s142 = sphi 0, %s128
    $region4: #{tpu_custom_call.1} parent=1 // loop_header_branch
      %17 = sbr.rel (%p15) target = $region8
    $region5: #{tpu_custom_call.1} parent=1 // loop_body
      %s19 = ssub.s32 %s14, 1
      %s20 = ssub.s32 %s14, 2
      %s27 = sadd.s32 1, %s22
      %p28 = scmp.ge.s32.totalorder %s27, 1
      %s29 = scalar_select %p28, 0, %s27
      %s30 = sadd.s32 1, %s21
      %s31 = scalar_select %p28, %s30, %s21
      %p32 = scmp.ge.s32.totalorder %s31, 2
      %s33 = scalar_select %p32, 0, %s31
      %s34 = ssub.s32 %s21, %s33
      %s35 = ssub.s32 %s22, %s29
      %s36 = sor.u32 %s34, %s35
      %p37 = scmp.eq.s32.totalorder %s36, 0
      %s39 = sadd.s32 %s38, 1
      %s40 = scalar_select %p37, %s38, %s39
      %p43 = pneg %p37
      %p44 = scmp.eq.s32.totalorder %s14, 1
      %p45 = por %p43, %p44
      %p46 = scmp.ne.s32.totalorder %s38, %s41
      %p47 = scmp.eq.s32.totalorder %s14, 0
      %p48 = por %p46, %p47
      %p49 = scmp.ne.s32.totalorder %s38, %s41
      %p50 = scmp.eq.s32.totalorder %s19, 1
      %p51 = por %p49, %p50
      %p52 = scmp.ne.s32.totalorder %s41, %s42
      %p53 = scmp.eq.s32.totalorder %s19, 0
      %p54 = por %p52, %p53
      %p55 = scmp.ne.s32.totalorder %s41, %s42
      %p56 = scmp.eq.s32.totalorder %s20, 1
      %p57 = por %p55, %p56
      %p59 = scmp.ne.s32.totalorder %s42, %s58
      %p60 = scmp.eq.s32.totalorder %s20, 0
      %p61 = por %p59, %p60
      %s63 = sadd.s32 %s62, 1
      %p66 = scmp.eq.s32.totalorder %s14, 1
      %p67 = scmp.ne.s32.totalorder %s62, %s64
      %p68 = scmp.eq.s32.totalorder %s14, 0
      %p69 = por %p67, %p68
      %p70 = scmp.ne.s32.totalorder %s62, %s64
      %p71 = scmp.eq.s32.totalorder %s19, 1
      %p72 = por %p70, %p71
      %p73 = scmp.ne.s32.totalorder %s64, %s65
      %p74 = scmp.eq.s32.totalorder %s19, 0
      %p75 = por %p73, %p74
      %p76 = scmp.ne.s32.totalorder %s64, %s65
      %p77 = scmp.eq.s32.totalorder %s20, 1
      %p78 = por %p76, %p77
      %p80 = scmp.ne.s32.totalorder %s65, %s79
      %p81 = scmp.eq.s32.totalorder %s20, 0
      %p82 = por %p80, %p81
      %s84 = sadd.s32 %s83, 1
      %p87 = scmp.eq.s32.totalorder %s14, 1
      %p88 = scmp.ne.s32.totalorder %s83, %s85
      %p89 = scmp.eq.s32.totalorder %s14, 0
      %p90 = por %p88, %p89
      %p91 = scmp.ne.s32.totalorder %s83, %s85
      %p92 = scmp.eq.s32.totalorder %s19, 1
      %p93 = por %p91, %p92
      %p94 = scmp.ne.s32.totalorder %s85, %s86
      %p95 = scmp.eq.s32.totalorder %s19, 0
      %p96 = por %p94, %p95
      %p97 = scmp.ne.s32.totalorder %s85, %s86
      %p98 = scmp.eq.s32.totalorder %s20, 1
      %p99 = por %p97, %p98
      %p101 = scmp.ne.s32.totalorder %s86, %s100
      %p102 = scmp.eq.s32.totalorder %s20, 0
      %p103 = por %p101, %p102
      %s105 = sadd.s32 %s104, 1
      %p108 = scmp.eq.s32.totalorder %s14, 1
      %p109 = scmp.ne.s32.totalorder %s104, %s106
      %p110 = scmp.eq.s32.totalorder %s14, 0
      %p111 = por %p109, %p110
      %p112 = scmp.ne.s32.totalorder %s104, %s106
      %p113 = scmp.eq.s32.totalorder %s19, 1
      %p114 = por %p112, %p113
      %p115 = scmp.ne.s32.totalorder %s106, %s107
      %p116 = scmp.eq.s32.totalorder %s19, 0
      %p117 = por %p115, %p116
      %p118 = scmp.ne.s32.totalorder %s106, %s107
      %p119 = scmp.eq.s32.totalorder %s20, 1
      %p120 = por %p118, %p119
      %p122 = scmp.ne.s32.totalorder %s107, %s121
      %p123 = scmp.eq.s32.totalorder %s20, 0
      %p124 = por %p122, %p123
      %s126 = sadd.s32 %s125, 1
      %p129 = scmp.eq.s32.totalorder %s14, 1
      %p130 = scmp.ne.s32.totalorder %s125, %s127
      %p131 = scmp.eq.s32.totalorder %s14, 0
      %p132 = por %p130, %p131
      %p133 = scmp.ne.s32.totalorder %s125, %s127
      %p134 = scmp.eq.s32.totalorder %s19, 1
      %p135 = por %p133, %p134
      %p136 = scmp.ne.s32.totalorder %s127, %s128
      %p137 = scmp.eq.s32.totalorder %s19, 0
      %p138 = por %p136, %p137
      %p139 = scmp.ne.s32.totalorder %s127, %s128
      %p140 = scmp.eq.s32.totalorder %s20, 1
      %p141 = por %p139, %p140
      %p143 = scmp.ne.s32.totalorder %s128, %s142
      %p144 = scmp.eq.s32.totalorder %s20, 0
      %p145 = por %p143, %p144
      %p146 = scmp.le.s32.totalorder 1, %s14
      %p147 = scmp.lt.s32.totalorder %s14, 3
      %p148 = pnand %p146, %p147
      %p149 = pneg %p148
      // Predicated region
      $region9: #{tpu_custom_call.1} parent=5 // pred_check
        _
      $region10: #{tpu_custom_call.1} parent=5 // pred_check_branch
        %151 = sbr.rel (%p148) target = $region12
      $region11: #{tpu_custom_call.1} parent=5 // pred_region
        %s152 = ssub.s32 %s14, 1
        // Predicated region
        $region13: #{tpu_custom_call.1} parent=11 // pred_check
          %p153 = pneg %p75
        $region14: #{tpu_custom_call.1} parent=11 // pred_check_branch
          %155 = sbr.rel (%p153) target = $region16
        $region15: #{tpu_custom_call.1} parent=11 // pred_region
          _
        $region16: #{tpu_custom_call.1} parent=11 // pred_fallthru
          _
        // Predicated region
        $region17: #{tpu_custom_call.1} parent=11 // pred_check
          %p156 = pneg %p96
        $region18: #{tpu_custom_call.1} parent=11 // pred_check_branch
          %158 = sbr.rel (%p156) target = $region20
        $region19: #{tpu_custom_call.1} parent=11 // pred_region
          _
        $region20: #{tpu_custom_call.1} parent=11 // pred_fallthru
          _
      $region12: #{tpu_custom_call.1} parent=5 // pred_fallthru
        _
      %p159 = scmp.lt.s32.totalorder %s14, 2
      // Predicated region
      $region21: #{tpu_custom_call.1} parent=5 // pred_check
        %p160 = pneg %p159
      $region22: #{tpu_custom_call.1} parent=5 // pred_check_branch
        %162 = sbr.rel (%p160) target = $region24
      $region23: #{tpu_custom_call.1} parent=5 // pred_region
        // Predicated region
        $region25: #{tpu_custom_call.1} parent=23 // pred_check
          %p163 = pneg %p48
        $region26: #{tpu_custom_call.1} parent=23 // pred_check_branch
          %165 = sbr.rel (%p163) target = $region28
        $region27: #{tpu_custom_call.1} parent=23 // pred_region
          %s166 = sand.u32 %s38, 1
          %s167 = scalar_lea.sflag [#allocation5], %s166
          %s168 = sand.u32 %s38, 1
          %s169 = smul.addr %s168, 8
          %s170 = scalar_lea.vmem [#allocation4], %s169
          %s171 = smul.u32 2, %s22
          %s173 = ssub.s32 128, 128
          %174 = vsyncadd %s167, %s173
          %s175 = smul.addr %s21, 2
          %s176 = sadd.s32 %s171, %s175
          %s177 = smul.addr %s176, 64
          %s178 = scalar_lea.hbm %s0, %s177
          %s180 = sshll.u32 %s170, 4
          %s181 = int_to_ptr.vmem [resolvable:$true] %s180
          %183 = dma.hbm_to_vmem [thread:$0]  %s178, 128, %s181, %s167
        $region28: #{tpu_custom_call.1} parent=23 // pred_fallthru
          _
      $region24: #{tpu_custom_call.1} parent=5 // pred_fallthru
        _
      %p184 = scmp.le.s32.totalorder 1, %s14
      %p185 = scmp.lt.s32.totalorder %s14, 3
      %p186 = pnand %p184, %p185
      %p187 = pneg %p186
      // Predicated region
      $region29: #{tpu_custom_call.1} parent=5 // pred_check
        _
      $region30: #{tpu_custom_call.1} parent=5 // pred_check_branch
        %189 = sbr.rel (%p186) target = $region32
      $region31: #{tpu_custom_call.1} parent=5 // pred_region
        %s190 = ssub.s32 %s14, 1
        %s191 = sand.u32 %s41, 1
        %s192 = scalar_lea.sflag [#allocation5], %s191
        %s193 = sand.u32 %s41, 1
        %s194 = smul.addr %s193, 8
        %s195 = scalar_lea.vmem [#allocation4], %s194
        // Predicated region
        $region33: #{tpu_custom_call.1} parent=31 // pred_check
          %p196 = pneg %p54
        $region34: #{tpu_custom_call.1} parent=31 // pred_check_branch
          %198 = sbr.rel (%p196) target = $region36
        $region35: #{tpu_custom_call.1} parent=31 // pred_region
          %199 = dma.done %s192, 128
        $region36: #{tpu_custom_call.1} parent=31 // pred_fallthru
          _
        %s200 = sand.u32 %s41, 1
        %s201 = scalar_lea.sflag [#allocation5], %s200
        %s202 = sand.u32 %s41, 1
        %s203 = smul.addr %s202, 8
        %s204 = scalar_lea.vmem [#allocation4], %s203
        %p205 = pneg %p54
        %p206 = pneg %p51
        %p207 = pneg %p75
        %p208 = pneg %p72
        %p209 = pneg %p96
        %p210 = pneg %p93
        %p211 = pneg %p117
        %p212 = pneg %p114
        %p213 = pneg %p138
        %p214 = pneg %p135
        %s215 = smul.u32 2, %s24
        %p216 = scmp.eq.s32.totalorder %s23, 0
        %p217 = scmp.eq.s32.totalorder %s24, 0
        %p218 = pnand %p216, %p217
        %p219 = pneg %p218
        // Predicated region
        $region37: #{tpu_custom_call.1} parent=31 // pred_check
          _
        $region38: #{tpu_custom_call.1} parent=31 // pred_check_branch
          %221 = sbr.rel (%p218) target = $region40
        $region39: #{tpu_custom_call.1} parent=31 // pred_region
          %vm222 = vcmask 3072
          %223 = vst.msk [vmem:[#allocation2] sm:$0xf] %vm222, 0.0
          %224 = vst.msk [vmem:[#allocation3] sm:$0xf] %vm222, 0.0
        $region40: #{tpu_custom_call.1} parent=31 // pred_fallthru
          _
        %v225 = vld [vmem:[%s195] sm:$0xff]
        %v226 = vld [vmem:[#allocation2] sm:$0xf]
        %v228 = vcombine.high %v225, %v225
        %vm230 = vcmask 1043456
        %v231 = vsel %vm230, %v225, 0.0
        %v232 = vsel %vm230, %v228, 0.0
        %v233 = vadd.f32 %v231, %v232
        %234 = vadd.xlane.f32.xlu0 %v233
        %v235 = vpop.xlane.xlu0 %234
        %v236 = vadd.f32 %v226, %v235
        %vm237 = vcmask 3072
        %238 = vst.msk [vmem:[#allocation2] sm:$0xf] %vm237, %v236
        %v239 = vld [vmem:[#allocation3] sm:$0xf]
        %v240 = vmul.f32 %v225, %v225
        %v242 = vcombine.high %v240, %v240
        %v244 = vsel %vm230, %v240, 0.0
        %v245 = vsel %vm230, %v242, 0.0
        %v246 = vadd.f32 %v244, %v245
        %247 = vadd.xlane.f32.xlu0 %v246
        %v248 = vpop.xlane.xlu0 %247
        %v249 = vadd.f32 %v239, %v248
        %250 = vst.msk [vmem:[#allocation3] sm:$0xf] %vm237, %v249
        %p251 = scmp.eq.s32.totalorder %s23, 1
        %p252 = pnand %p251, %p217
        %p253 = pneg %p252
        // Predicated region
        $region41: #{tpu_custom_call.1} parent=31 // pred_check
          _
        $region42: #{tpu_custom_call.1} parent=31 // pred_check_branch
          %255 = sbr.rel (%p252) target = $region44
        $region43: #{tpu_custom_call.1} parent=31 // pred_region
          %v256 = vld [vmem:[#allocation2] sm:$0xf]
          %v257 = vrcp.pop 512.0
          %v258 = vmul.f32 %v256, %v257
          %v259 = vld [vmem:[#allocation3] sm:$0xf]
          %v260 = vmul.f32 %v259, %v257
          %v261 = vmul.f32 %v258, %v258
          %v262 = vsub.f32 %v260, %v261
          %v263 = vadd.f32 %v262, 1e-05
          %v264 = vrsqrt.pop %v263
          %v265 = vld [vmem:[%s1] sm:$0xf]
          %v266 = vmul.f32 %v265, %v264
          %267 = vst.msk [vmem:[%s3] sm:$0xf] %vm237, %v266
          %v268 = vld [vmem:[%s2] sm:$0xf]
          %v269 = vmul.f32 %v258, %v266
          %v270 = vsub.f32 %v268, %v269
          %271 = vst.msk [vmem:[%s4] sm:$0xf] %vm237, %v270
        $region44: #{tpu_custom_call.1} parent=31 // pred_fallthru
          _
        // Predicated region
        $region45: #{tpu_custom_call.1} parent=31 // pred_check
          %p272 = pneg %p114
        $region46: #{tpu_custom_call.1} parent=31 // pred_check_branch
          %274 = sbr.rel (%p272) target = $region48
        $region47: #{tpu_custom_call.1} parent=31 // pred_region
          _
        $region48: #{tpu_custom_call.1} parent=31 // pred_fallthru
          _
        // Predicated region
        $region49: #{tpu_custom_call.1} parent=31 // pred_check
          %p275 = pneg %p135
        $region50: #{tpu_custom_call.1} parent=31 // pred_check_branch
          %277 = sbr.rel (%p275) target = $region52
        $region51: #{tpu_custom_call.1} parent=31 // pred_region
          _
        $region52: #{tpu_custom_call.1} parent=31 // pred_fallthru
          _
        // Predicated region
        $region53: #{tpu_custom_call.1} parent=31 // pred_check
          %p278 = pneg %p114
        $region54: #{tpu_custom_call.1} parent=31 // pred_check_branch
          %280 = sbr.rel (%p278) target = $region56
        $region55: #{tpu_custom_call.1} parent=31 // pred_region
          _
        $region56: #{tpu_custom_call.1} parent=31 // pred_fallthru
          _
        // Predicated region
        $region57: #{tpu_custom_call.1} parent=31 // pred_check
          %p281 = pneg %p135
        $region58: #{tpu_custom_call.1} parent=31 // pred_check_branch
          %283 = sbr.rel (%p281) target = $region60
        $region59: #{tpu_custom_call.1} parent=31 // pred_region
          _
        $region60: #{tpu_custom_call.1} parent=31 // pred_fallthru
          _
      $region32: #{tpu_custom_call.1} parent=5 // pred_fallthru
        _
      %p284 = scmp.le.s32.totalorder 2, %s14
      // Predicated region
      $region61: #{tpu_custom_call.1} parent=5 // pred_check
        %p285 = pneg %p284
      $region62: #{tpu_custom_call.1} parent=5 // pred_check_branch
        %287 = sbr.rel (%p285) target = $region64
      $region63: #{tpu_custom_call.1} parent=5 // pred_region
        %s288 = ssub.s32 %s14, 2
      $region64: #{tpu_custom_call.1} parent=5 // pred_fallthru
        _
    $region6: #{tpu_custom_call.1} parent=1 // loop_footer
      %s18 = sadd.s32 1, %s14
    $region7: #{tpu_custom_call.1} parent=1 // loop_footer_branch
      %13 = sbr.rel target = $region3
    $region8: #{tpu_custom_call.1} parent=1 // loop_exit
      _
    %289 = vsyncpa [#allocation5], 1
    %s290 = scalar_lea.sflag [#allocation5], 1
    %291 = vsyncpa %s290, 1

</llo_original>
